<compile_context>
chip_gen: v5e
topology: v5e:2x2
jax: 0.10.0
libtpu: 0.0.40
codegen_flags: <defaults>
</compile_context>

<pallas_src>
import functools

import jax
import jax.numpy as jnp
from jax.experimental import pallas as pl
from jax.experimental.pallas import tpu as pltpu


# ----------------------------- in-kernel helpers -----------------------------

def _conv3x3_taps(x, mask_ref, w, mxu_dtype, roll_np):
    """im2col for a 3x3 same-padded conv in "spatial on lanes" layout.

    x: (C, L) float32, L = NB*H*W, lanes ordered (image, y, x) row-major.
    mask_ref: (9, L) float32 ref of 0/1 border-validity masks (tap-major).
    Returns (9*C, L) taps in `mxu_dtype`; row k = (dy*3+dx)*C + ci holds x[ci]
    shifted by (dy-1, dx-1) with out-of-image positions zeroed, matching
    w_hwio.reshape(9*C, Cout).T as the conv weight matrix.
    """
    L = x.shape[-1]
    taps = []
    for dy in range(3):
        for dx in range(3):
            k = dy * 3 + dx
            off = (dy - 1) * w + (dx - 1)          # want tap[p] = x[p + off]
            if off == 0:
                t = x
            else:
                shift = (-off) % L if roll_np else off % L
                t = pltpu.roll(x, shift=shift, axis=1)   # XLU lane rotation
            if k != 4:                              # centre tap: always valid
                t = t * mask_ref[pl.ds(k, 1), :]    # zero out-of-image reads
            taps.append(t)
    # sublane concat (C multiples of 8 -> aligned), single cast to MXU dtype
    return jnp.concatenate(taps, axis=0).astype(mxu_dtype)


@functools.lru_cache()
def _roll_moves_to_higher_lanes():
    """Probe pltpu.roll's direction once on-device (np.roll convention or not)
    so the im2col tap shifts are robust to either convention."""
    def k(x_ref, o_ref):
        o_ref[...] = pltpu.roll(x_ref[...], shift=1, axis=1)

    x = jnp.tile(jnp.arange(128, dtype=jnp.float32)[None, :], (8, 1))
    y = pl.pallas_call(k, out_shape=jax.ShapeDtypeStruct((8, 128), jnp.float32))(x)
    return bool(y[0, 1] == 0.0)     # np.roll([0..127], 1)[1] == 0


# ------------------------------ wrapper helpers -------------------------------

def _interp_matrix(out_size, in_size):
    """Row-stochastic 1D bilinear interpolation matrix (align_corners=False)."""
    scale = in_size / out_size
    dst = jnp.arange(out_size, dtype=jnp.float32)
    src = jnp.clip((dst + 0.5) * scale - 0.5, 0.0, None)
    x0 = jnp.minimum(jnp.floor(src).astype(jnp.int32), in_size - 1)
    x1 = jnp.minimum(x0 + 1, in_size - 1)
    w1 = jnp.clip(src - x0.astype(jnp.float32), 0.0, 1.0)
    m = jnp.zeros((out_size, in_size), jnp.float32)
    m = m.at[jnp.arange(out_size), x0].add(1.0 - w1)
    m = m.at[jnp.arange(out_size), x1].add(w1)
    return m


def _resize_matrix(hl, wl, hh, wh):
    """(hl*wl, hh*wh) flattened bilinear resize operator (align_corners=False)."""
    return jnp.kron(_interp_matrix(hl, hh), _interp_matrix(wl, wh))


def _tap_masks(h, w, nb):
    """(9, nb*h*w) 0/1 masks: tap k=(dy*3+dx) is valid where the shifted source
    pixel lies inside the image (3x3 conv zero padding)."""
    y = jnp.arange(h, dtype=jnp.float32).reshape(h, 1)
    x = jnp.arange(w, dtype=jnp.float32).reshape(1, w)
    rows = []
    for dy in range(3):
        for dx in range(3):
            m = jnp.ones((h, w), jnp.float32)
            if dy == 0:
                m = m * (y >= 1.0)
            if dy == 2:
                m = m * (y <= h - 2.0)
            if dx == 0:
                m = m * (x >= 1.0)
            if dx == 2:
                m = m * (x <= w - 2.0)
            rows.append(jnp.tile(m.reshape(1, h * w), (1, nb)))
    return jnp.concatenate(rows, axis=0)


def fold_weights(params, mxu_dtype):
    """Fold BN (inference running stats) scale into the conv weights and cast
    all matmul operands to `mxu_dtype`.  Shared by the kernel wrapper and the
    matched-precision reference so both use bit-identical weights."""
    oc = params['w_high'].shape[-1]

    def fold(w, s):
        return (w * s.reshape(1, 1, 1, -1)).astype(mxu_dtype)

    return dict(
        w_high=fold(params['w_high'], params['s_high'].reshape(-1)),
        b_high=params['b_high'].reshape(1, 1, 1, -1),
        w_low=fold(params['w_low'], params['s_low'].reshape(-1)),
        b_low=params['b_low'].reshape(1, 1, 1, -1),
        w_fus_a=params['w_fus'][:, :, :oc, :].astype(mxu_dtype),
        w_fus_b=params['w_fus'][:, :, oc:, :].astype(mxu_dtype),
        b_fus=params['b_fus'].reshape(1, 1, 1, -1),
        w_seg=params['w_seg'].astype(mxu_dtype),
        b_seg=params['b_seg'].reshape(1, 1, 1, -1),
    )


def make_params(key, high_ch, low_ch, out_ch, num_classes):
    ks = jax.random.split(key, 8)
    eps = 1e-5

    def bn(k, c):
        kg, kb, km, kv = jax.random.split(k, 4)
        gamma = 1.0 + 0.1 * jax.random.normal(kg, (c,), jnp.float32)
        beta = 0.1 * jax.random.normal(kb, (c,), jnp.float32)
        mean = 0.1 * jax.random.normal(km, (c,), jnp.float32)
        var = 1.0 + 0.1 * jnp.abs(jax.random.normal(kv, (c,), jnp.float32))
        scale = gamma / jnp.sqrt(var + eps)
        bias = beta - mean * scale
        return scale.reshape(1, 1, c), bias.reshape(1, 1, c)

    s_high, b_high = bn(ks[1], out_ch)
    s_low, b_low = bn(ks[3], out_ch)
    return dict(
        w_high=0.1 * jax.random.normal(ks[0], (3, 3, high_ch, out_ch), jnp.float32),
        s_high=s_high, b_high=b_high,
        w_low=0.1 * jax.random.normal(ks[2], (3, 3, low_ch, out_ch), jnp.float32),
        s_low=s_low, b_low=b_low,
        w_fus=0.1 * jax.random.normal(ks[4], (3, 3, 2 * out_ch, out_ch), jnp.float32),
        b_fus=0.1 * jax.random.normal(ks[5], (1, 1, out_ch), jnp.float32),
        w_seg=0.1 * jax.random.normal(ks[6], (out_ch, num_classes), jnp.float32),
        b_seg=0.1 * jax.random.normal(ks[7], (1, 1, num_classes), jnp.float32),
    )


# ------------------------------- pallas wrapper --------------------------------

def diff_decoder(high, low, diff, params, *, mxu_dtype=jnp.bfloat16, nb=None):
    """Fused DiffDecoder forward.  Inputs/outputs are NHWC; internally the kernel
    works in (channels, batch_block*H*W) "spatial on lanes" layout."""
    n, hh, wh, ch = high.shape
    _, hl, wl, cl = low.shape
    oc = params['w_high'].shape[-1]
    nc = params['w_seg'].shape[-1]

    # Batch folding: NB images share the lane (N) dimension of every matmul.
    # Choose NB so the lane block is a multiple of 128 (full vregs, unmasked
    # stores) while keeping >= 2 grid steps for v7x megacore when possible.
    if nb is None:
        nb = n
        for cand in range(1, n + 1):
            if n % cand == 0 and (cand * hh * wh) % 128 == 0 \
                    and (cand * hl * wl) % 128 == 0:
                nb = cand
                break
    assert n % nb == 0
    lh = nb * hh * wh
    ll = nb * hl * wl

    roll_np = _roll_moves_to_higher_lanes()

    def to_lanes(x):                                    # (N,H,W,C) -> (C, N*H*W)
        return jnp.transpose(x, (3, 0, 1, 2)).reshape(x.shape[-1], -1)

    diff_f, high_f, low_f = to_lanes(diff), to_lanes(high), to_lanes(low)

    f = fold_weights(params, mxu_dtype)
    w_hi = f['w_high'].reshape(9 * ch, oc).T            # (oc, 9*ch)
    b_hi = f['b_high'].reshape(oc, 1)
    w_lo = f['w_low'].reshape(9 * cl, oc).T
    b_lo = f['b_low'].reshape(oc, 1)
    w_fa = f['w_fus_a'].reshape(9 * oc, oc).T           # high half of concat
    w_fb = f['w_fus_b'].reshape(9 * oc, oc).T           # low half of concat
    b_fu = f['b_fus'].reshape(oc, 1)
    w_sg = f['w_seg'].T                                 # (nc, oc)
    b_sg = f['b_seg'].reshape(nc, 1)

    # per-block block-diagonal bilinear-resize operator (lh lanes -> ll lanes)
    r = _resize_matrix(hl, wl, hh, wh)                  # (hl*wl, hh*wh) f32
    rsz = jnp.kron(jnp.eye(nb, dtype=jnp.float32), r.T).astype(mxu_dtype)

    mask_h = _tap_masks(hh, wh, nb)                     # (9, lh) f32
    mask_l = _tap_masks(hl, wl, nb)                     # (9, ll) f32

    def kernel(diff_ref, high_ref, low_ref, mh_ref, ml_ref,
               whi_ref, bhi_ref, rsz_ref, wlo_ref, blo_ref,
               wfa_ref, wfb_ref, bfu_ref, wsg_ref, bsg_ref,
               fus_ref, prd_ref):
        # ---- high branch: sigmoid gate + conv_high (BN folded) + ReLU -------
        sig = jax.nn.sigmoid(diff_ref[...])                       # (1, lh)
        hi = high_ref[...] * (sig + 1.0)                          # diff*x + x
        taps = _conv3x3_taps(hi, mh_ref, wh, mxu_dtype, roll_np)  # (9*ch, lh)
        hi_c = jnp.dot(whi_ref[...], taps, preferred_element_type=jnp.float32)
        hi_c = jnp.maximum(hi_c + bhi_ref[...], 0.0)              # (oc, lh)
        # ---- bilinear resize: one matmul; the gate rides along as a row -----
        cat = jnp.concatenate([hi_c, sig], axis=0).astype(mxu_dtype)  # (oc+1, lh)
        up = jnp.dot(cat, rsz_ref[...], preferred_element_type=jnp.float32)
        hi_up = up[:oc, :]                                        # (oc, ll)
        sig_up = up[oc:oc + 1, :]                                 # (1, ll)
        # ---- low branch: gate + conv_low (BN folded) + ReLU ------------------
        lo = low_ref[...] * (sig_up + 1.0)
        taps = _conv3x3_taps(lo, ml_ref, wl, mxu_dtype, roll_np)
        lo_c = jnp.dot(wlo_ref[...], taps, preferred_element_type=jnp.float32)
        lo_c = jnp.maximum(lo_c + blo_ref[...], 0.0)              # (oc, ll)
        # ---- fusion 3x3 conv: split weight halves instead of channel concat --
        taps_a = _conv3x3_taps(hi_up, ml_ref, wl, mxu_dtype, roll_np)
        taps_b = _conv3x3_taps(lo_c, ml_ref, wl, mxu_dtype, roll_np)
        fus = (jnp.dot(wfa_ref[...], taps_a, preferred_element_type=jnp.float32)
               + jnp.dot(wfb_ref[...], taps_b, preferred_element_type=jnp.float32)
               + bfu_ref[...])                                    # (oc, ll)
        fus_ref[...] = fus.astype(fus_ref.dtype)
        # ---- 1x1 seg_out conv -------------------------------------------------
        prd = jnp.dot(wsg_ref[...], fus.astype(mxu_dtype),
                      preferred_element_type=jnp.float32) + bsg_ref[...]
        prd_ref[...] = prd.astype(prd_ref.dtype)

    def img_spec(c, l):                         # blocked along the lane axis only
        return pl.BlockSpec((c, l), lambda b: (0, b))

    def const_spec(shape):
        # NOTE: at production channel counts add pipeline_mode=pl.Buffered(1)
        # here (grid-invariant weights need no double buffer; matters on v7x's
        # 64 MiB VMEM, irrelevant at these sizes).
        nd = len(shape)
        return pl.BlockSpec(shape, lambda b, _nd=nd: (0,) * _nd)

    flops = 2 * n * (oc * 9 * ch * hh * wh                # conv_high
                     + (oc + 1) * hh * wh * hl * wl       # bilinear resize
                     + oc * 9 * cl * hl * wl              # conv_low
                     + 2 * oc * 9 * oc * hl * wl          # conv_fusion (2 halves)
                     + nc * oc * hl * wl)                 # seg_out 1x1
    ins = (diff_f, high_f, low_f, mask_h, mask_l, w_hi, b_hi, rsz,
           w_lo, b_lo, w_fa, w_fb, b_fu, w_sg, b_sg)
    out_bytes = 4 * n * hl * wl * (oc + nc)
    cost = pl.CostEstimate(
        flops=int(flops),
        transcendentals=int(n * hh * wh),
        bytes_accessed=int(sum(int(a.size) * a.dtype.itemsize for a in ins)
                           + out_bytes))

    fusion_f, pred_f = pl.pallas_call(
        kernel,
        out_shape=(jax.ShapeDtypeStruct((oc, n * hl * wl), jnp.float32),
                   jax.ShapeDtypeStruct((nc, n * hl * wl), jnp.float32)),
        grid_spec=pltpu.PrefetchScalarGridSpec(
            num_scalar_prefetch=0,
            grid=(n // nb,),
            in_specs=[img_spec(1, lh), img_spec(ch, lh), img_spec(cl, ll),
                      const_spec((9, lh)), const_spec((9, ll)),
                      const_spec((oc, 9 * ch)), const_spec((oc, 1)),
                      const_spec((lh, ll)),
                      const_spec((oc, 9 * cl)), const_spec((oc, 1)),
                      const_spec((oc, 9 * oc)), const_spec((oc, 9 * oc)),
                      const_spec((oc, 1)),
                      const_spec((nc, oc)), const_spec((nc, 1))],
            out_specs=[img_spec(oc, ll), img_spec(nc, ll)]),
        compiler_params=pltpu.CompilerParams(
            dimension_semantics=("parallel",)),      # batch blocks independent
        cost_estimate=cost,
    )(*ins)

    fusion = fusion_f.reshape(oc, n, hl, wl).transpose(1, 2, 3, 0)
    predict = pred_f.reshape(nc, n, hl, wl).transpose(1, 2, 3, 0)
    return fusion, predict


# ------------------------------- references ------------------------------------

def diff_decoder_ref(high, low, diff, params):
    """Faithful float32 reference (PyTorch DiffDecoder semantics, NHWC)."""
    n, hh, wh, _ = high.shape
    _, hl, wl, _ = low.shape
    prec = jax.lax.Precision.HIGHEST
    m = _resize_matrix(hl, wl, hh, wh)

    def conv3x3(x, w):
        return jax.lax.conv_general_dilated(
            x, w, (1, 1), ((1, 1), (1, 1)),
            dimension_numbers=('NHWC', 'HWIO', 'NHWC'), precision=prec)

    def resize(x):
        c = x.shape[-1]
        flat = x.reshape(n, hh * wh, c)
        return jnp.einsum('op,bpc->boc', m, flat,
                          precision=prec).reshape(n, hl, wl, c)

    sig = jax.nn.sigmoid(diff)
    hi = high * (sig + 1.0)
    hi_c = jax.nn.relu(conv3x3(hi, params['w_high']) * params['s_high'][None]
                       + params['b_high'][None])
    hi_up = resize(hi_c)
    sig_up = resize(sig)
    lo = low * (sig_up + 1.0)
    lo_c = jax.nn.relu(conv3x3(lo, params['w_low']) * params['s_low'][None]
                       + params['b_low'][None])
    cat = jnp.concatenate([hi_up, lo_c], axis=-1)
    fus = conv3x3(cat, params['w_fus']) + params['b_fus'][None]
    pred = jnp.einsum('bhwi,ic->bhwc', fus, params['w_seg'],
                      precision=prec) + params['b_seg'][None]
    return fus, pred


def diff_decoder_ref_matched(high, low, diff, params, mxu_dtype=jnp.bfloat16):
    """Pure-JAX (XLA) implementation of the exact numerical algorithm the Pallas
    kernel runs (BN folded into weights, matmul/conv operands cast to mxu_dtype,
    float32 accumulation) -> tight correctness gate."""
    n, hh, wh, _ = high.shape
    _, hl, wl, _ = low.shape
    oc = params['w_high'].shape[-1]
    f = fold_weights(params, mxu_dtype)
    r = _resize_matrix(hl, wl, hh, wh).astype(mxu_dtype)

    def conv3x3(x, w):
        return jax.lax.conv_general_dilated(
            x.astype(mxu_dtype), w, (1, 1), ((1, 1), (1, 1)),
            dimension_numbers=('NHWC', 'HWIO', 'NHWC'),
            preferred_element_type=jnp.float32)

    def resize(x):
        c = x.shape[-1]
        flat = x.reshape(n, hh * wh, c).astype(mxu_dtype)
        out = jnp.einsum('qp,bpc->bqc', r, flat,
                         preferred_element_type=jnp.float32)
        return out.reshape(n, hl, wl, c)

    sig = jax.nn.sigmoid(diff)
    hi = high * (sig + 1.0)
    hi_c = jnp.maximum(conv3x3(hi, f['w_high']) + f['b_high'], 0.0)
    up = resize(jnp.concatenate([hi_c, sig], axis=-1))
    hi_up, sig_up = up[..., :oc], up[..., oc:oc + 1]
    lo = low * (sig_up + 1.0)
    lo_c = jnp.maximum(conv3x3(lo, f['w_low']) + f['b_low'], 0.0)
    fus = conv3x3(hi_up, f['w_fus_a']) + conv3x3(lo_c, f['w_fus_b']) + f['b_fus']
    pred = jnp.einsum('bhwi,ic->bhwc', fus.astype(mxu_dtype), f['w_seg'],
                      preferred_element_type=jnp.float32) + f['b_seg']
    return fus, pred


# ------------------------------------ main --------------------------------------

if __name__ == "__main__":
    key = jax.random.PRNGKey(0)
    k_hi, k_lo, k_df, k_p = jax.random.split(key, 4)

    N = 4                                   # folded 2 per grid step -> grid=(2,)
    HIGH_CH, LOW_CH, OUT_CH, NUM_CLASSES = 8, 8, 16, 4
    HH = WH = 8                             # high-level (coarse) spatial size
    HL = WL = 16                            # low-level (fine) spatial size

    high = jax.random.normal(k_hi, (N, HH, WH, HIGH_CH), jnp.float32)
    low = jax.random.normal(k_lo, (N, HL, WL, LOW_CH), jnp.float32)
    diff = jax.random.normal(k_df, (N, HH, WH, 1), jnp.float32)

    params = make_params(k_p, HIGH_CH, LOW_CH, OUT_CH, NUM_CLASSES)

    fusion, predict = diff_decoder(high, low, diff, params)   # bf16 MXU operands
    jax.block_until_ready((fusion, predict))
    assert fusion.shape == (N, HL, WL, OUT_CH)
    assert predict.shape == (N, HL, WL, NUM_CLASSES)

    # Tight gate: same algorithm / same (bf16 operand, f32 accumulate) precision
    # in plain JAX -- only accumulation-order noise should remain.
    fus_m, prd_m = diff_decoder_ref_matched(high, low, diff, params)
    assert bool(jnp.allclose(fusion, fus_m, atol=1e-2, rtol=1e-2))
    assert bool(jnp.allclose(predict, prd_m, atol=1e-2, rtol=1e-2))

    # Drift gate: bf16-MXU kernel against the faithful float32 reference.
    fus_r, prd_r = diff_decoder_ref(high, low, diff, params)
    assert bool(jnp.allclose(fusion, fus_r, atol=1e-1, rtol=1e-1))
    assert bool(jnp.allclose(predict, prd_r, atol=1e-1, rtol=1e-1))

    print("KERNEL_OK")
</pallas_src>

<mosaic_0001>
module attributes {stable_mosaic.version = 11 : i64} {
  func.func @k(%arg0: memref<8x128xf32, #tpu.memory_space<vmem>>, %arg1: memref<8x128xf32, #tpu.memory_space<vmem>>) attributes {dimension_semantics = [], scalar_prefetch = 0 : i64, scratch_operands = 0 : i64, tpu.core_type = #tpu.core_type<tc>} {
    %c0 = arith.constant 0 : index
    %c0_0 = arith.constant 0 : index
    %0 = vector.load %arg0[%c0, %c0_0] : memref<8x128xf32, #tpu.memory_space<vmem>>, vector<8x128xf32>
    %c1_i32 = arith.constant 1 : i32
    %1 = tpu.dynamic_rotate %0 by %c1_i32 dim 1 : vector<8x128xf32>, i32 -> vector<8x128xf32>
    %c0_1 = arith.constant 0 : index
    %c0_2 = arith.constant 0 : index
    %2 = vector.load %arg1[%c0_1, %c0_2] : memref<8x128xf32, #tpu.memory_space<vmem>>, vector<8x128xf32>
    tpu.vector_store %arg1[%c0_1, %c0_2], %1 {strides = array<i32>} : memref<8x128xf32, #tpu.memory_space<vmem>>, vector<8x128xf32>,
    return
  }
}

</mosaic_0001>

<llo_original>
// kernel: tpu_custom_call.1
$region0: #{tpu_custom_call.1}
  #allocation0 [shape = 'u32[]', space=smem, size = 0x4, offset = 0x4, fixed_abs, tag = 'smem constant byte address 0x4 - core index']
  #allocation1 [shape = 'u32[72,128]{1,0:T(1,128)}', space=vmem, size = 0x9000, scoped, tag = 'internal scratch']
  %s0 = inlined_call_operand.hbm [shape: f32[8,128], index: 0, kind: input, shape index: {}]
  %s1 = inlined_call_operand.hbm [shape: f32[8,128], index: 1, kind: output, shape index: {}]
  %s2 = sld [smem:[#allocation0]]
  $region18: #{tpu_custom_call.1} parent=0
    _
  %s4 = ssub.s32 1, %s2
  %s5 = scalar_select 0, %s4, %s2
  $region1: #{tpu_custom_call.1} parent=0
    #allocation2 [shape = 'u8[4096]{0}', space=vmem, size = 0x1000, scoped, tag = 'input window, operand 0, single buffered']
    #allocation3 [shape = 's32[1]{0}', space=sflag, size = 0x4, scoped, tag = 'scoped memory for tpu_custom_call.1']
    #allocation4 [shape = 's32[1]{0}', space=sflag, size = 0x4, scoped, tag = 'scoped memory for tpu_custom_call.1']
    #allocation5 [shape = 'u8[4096]{0}', space=vmem, size = 0x1000, scoped, tag = 'output window, operand 0, single buffered']
    %6 = vsyncpa [#allocation3], 0
    %7 = vsyncpa [#allocation4], 0
    // Predicated region
    $region2: #{tpu_custom_call.1} parent=1 // pred_check
      _
    $region3: #{tpu_custom_call.1} parent=1 // pred_check_branch
      %9 = sbr.rel (0) target = $region5
    $region4: #{tpu_custom_call.1} parent=1 // pred_region
      %11 = vsyncadd [#allocation3], 0
      %s13 = sshll.u32 %s0, 4
      %s14 = int_to_ptr.hbm [resolvable:$true] %s13
      %s15 = sshll.u32 [#allocation2], 4
      %s16 = int_to_ptr.vmem [resolvable:$true] %s15
      %18 = dma.hbm_to_vmem [thread:$0]  %s14, 128, %s16, [#allocation3]
    $region5: #{tpu_custom_call.1} parent=1 // pred_fallthru
      _
    // Predicated region
    $region6: #{tpu_custom_call.1} parent=1 // pred_check
      _
    $region7: #{tpu_custom_call.1} parent=1 // pred_check_branch
      %20 = sbr.rel (0) target = $region9
    $region8: #{tpu_custom_call.1} parent=1 // pred_region
      %22 = dma.done [#allocation3], 128
    $region9: #{tpu_custom_call.1} parent=1 // pred_fallthru
      _
    %v23 = vld [vmem:[#allocation2] sm:$0xff]
    %24 = vrot.lane.b32.xlu0 %v23, 1
    %v25 = vpop.permute.xlu0 %24
    %26 = vst [vmem:[#allocation5] sm:$0xff] %v25
    // Predicated region
    $region10: #{tpu_custom_call.1} parent=1 // pred_check
      _
    $region11: #{tpu_custom_call.1} parent=1 // pred_check_branch
      %28 = sbr.rel (0) target = $region13
    $region12: #{tpu_custom_call.1} parent=1 // pred_region
      %30 = vsyncadd [#allocation4], 0
      %s32 = sshll.u32 [#allocation5], 4
      %s33 = int_to_ptr.vmem [resolvable:$true] %s32
      %s34 = sshll.u32 %s1, 4
      %s35 = int_to_ptr.hbm [resolvable:$true] %s34
      %37 = dma.vmem_to_hbm [thread:$0]  %s33, 128, %s35, [#allocation4]
    $region13: #{tpu_custom_call.1} parent=1 // pred_fallthru
      _
    // Predicated region
    $region14: #{tpu_custom_call.1} parent=1 // pred_check
      _
    $region15: #{tpu_custom_call.1} parent=1 // pred_check_branch
      %39 = sbr.rel (0) target = $region17
    $region16: #{tpu_custom_call.1} parent=1 // pred_region
      %41 = dma.done [#allocation4], 128
    $region17: #{tpu_custom_call.1} parent=1 // pred_fallthru
      _
    %42 = vsyncpa [#allocation3], 1
    %43 = vsyncpa [#allocation4], 1

</llo_original>
